<compile_context>
chip_gen: v5e
topology: v5e:2x2
jax: 0.10.0
libtpu: 0.0.40
codegen_flags: <defaults>
</compile_context>

<pallas_src>
import functools

import jax
import jax.numpy as jnp
from jax.experimental import pallas as pl
from jax.experimental.pallas import tpu as pltpu


def _round_up(x, m):
    return ((x + m - 1) // m) * m


def _resblock_kernel(x_ref, w_ref, b_ref, o_ref, buf_ref, *, H, W, pad):
    # x_ref  : (1, C, H*W)   NCHW image, spatial flattened onto the lane axis
    # w_ref  : (C, 9*C)      w_ref[co, (kh*3 + kw)*C + ci] = torch_w[co, ci, kh, kw]
    # b_ref  : (C, 1)        conv bias
    # o_ref  : (1, C, H*W)
    # buf_ref: (C, pad + H*W + W + 1) zero-bordered staging buffer (VMEM scratch)
    C = x_ref.shape[1]
    HW = H * W

    # Load the image once; it is both the conv input and the identity shortcut.
    x = x_ref[0].astype(jnp.float32)                       # (C, HW)

    # Zero-bordered staging buffer; interior write is lane-aligned (pad % 128 == 0).
    buf_ref[...] = jnp.zeros(buf_ref.shape, buf_ref.dtype)
    buf_ref[:, pad:pad + HW] = x

    # Column masks: kill the taps that would otherwise wrap across row ends
    # (these correspond to the left/right zero padding of the conv).
    col = jax.lax.broadcasted_iota(jnp.int32, (1, HW), 1) % W
    keep_left = col != 0              # applied when kw == 0 (reads column w-1)
    keep_right = col != (W - 1)       # applied when kw == 2 (reads column w+1)

    wmat = w_ref[...]                                      # (C, 9*C), loaded once
    acc = jnp.zeros((C, HW), jnp.float32)                  # small, bounded accumulator

    # 3x3 conv = 9 shifted windows of the staging buffer, accumulated on the VPU.
    for kh in range(3):
        for kw in range(3):
            s = pad + (kh - 1) * W + (kw - 1)              # static lane offset of this tap
            win = buf_ref[:, s:s + HW]                     # (Cin, HW), single strided load
            if kw == 0:
                win = jnp.where(keep_left, win, 0.0)
            elif kw == 2:
                win = jnp.where(keep_right, win, 0.0)
            for ci in range(C):
                k = (kh * 3 + kw) * C + ci
                wcol = wmat[:, k:k + 1]                    # (Cout, 1) weight column
                acc = acc + wcol * win[ci:ci + 1, :]       # (Cout, HW) lane-dense MAC

    out = jnp.maximum(acc + b_ref[...] + x, 0.0)           # bias + residual + ReLU
    o_ref[0] = out.astype(o_ref.dtype)


def residual_block_forward(x_nchw, w_oihw, bias):
    """ResidualBlock forward: relu(conv3x3(x, w, b) + x). Input/output NCHW."""
    B, C, H, W = x_nchw.shape
    HW = H * W
    pad = _round_up(W + 1, 128)            # lane-aligned interior offset in the staging buffer
    buf_len = pad + HW + W + 1

    x_flat = x_nchw.reshape(B, C, HW)      # merges contiguous dims: no data movement
    # torch OIHW -> (Cout, kh, kw, Cin) -> (Cout, 9*Cin)   (144 floats for C=4)
    w_k = jnp.transpose(w_oihw, (0, 2, 3, 1)).reshape(C, 9 * C)
    b_k = bias.reshape(C, 1)

    kernel = functools.partial(_resblock_kernel, H=H, W=W, pad=pad)

    out_flat = pl.pallas_call(
        kernel,
        out_shape=jax.ShapeDtypeStruct((B, C, HW), x_nchw.dtype),
        grid_spec=pltpu.PrefetchScalarGridSpec(
            num_scalar_prefetch=0,
            grid=(B,),
            in_specs=[
                pl.BlockSpec((1, C, HW), lambda b: (b, 0, 0)),
                pl.BlockSpec((C, 9 * C), lambda b: (0, 0)),
                pl.BlockSpec((C, 1), lambda b: (0, 0)),
            ],
            out_specs=pl.BlockSpec((1, C, HW), lambda b: (b, 0, 0)),
            scratch_shapes=[pltpu.VMEM((C, buf_len), jnp.float32)],
        ),
        compiler_params=pltpu.CompilerParams(
            dimension_semantics=("parallel",)),
    )(x_flat, w_k, b_k)

    return out_flat.reshape(B, C, H, W)


def _reference(x_nchw, w_oihw, bias):
    conv = jax.lax.conv_general_dilated(
        x_nchw, w_oihw, window_strides=(1, 1), padding="SAME",
        dimension_numbers=("NCHW", "OIHW", "NCHW"))
    conv = conv + bias.reshape(1, -1, 1, 1)
    return jnp.maximum(conv + x_nchw, 0.0)


if __name__ == "__main__":
    B, C, H, W = 2, 4, 16, 16
    key = jax.random.PRNGKey(0)
    kx, kw, kb = jax.random.split(key, 3)

    x = jax.random.normal(kx, (B, C, H, W), dtype=jnp.float32)
    # Deterministic "kaiming-ish" init for Conv2d(C, C, 3) weights + bias.
    w = jax.random.normal(kw, (C, C, 3, 3), dtype=jnp.float32) * (1.0 / (3.0 * (C ** 0.5)))
    b = jax.random.normal(kb, (C,), dtype=jnp.float32) * 0.1

    out = residual_block_forward(x, w, b)
    jax.block_until_ready(out)

    ref = _reference(x, w, b)
    assert out.shape == (B, C, H, W)
    assert jnp.allclose(out, ref, atol=1e-4, rtol=1e-4), "mismatch vs reference"

    print("KERNEL_OK")
</pallas_src>

<mosaic_0001>
module attributes {stable_mosaic.version = 11 : i64} {
  func.func @_resblock_kernel(%arg0: i32, %arg1: memref<1x4x256xf32, #tpu.memory_space<vmem>>, %arg2: memref<4x36xf32, #tpu.memory_space<vmem>>, %arg3: memref<4x1xf32, #tpu.memory_space<vmem>>, %arg4: memref<1x4x256xf32, #tpu.memory_space<vmem>>, %arg5: memref<4x401xf32, #tpu.memory_space<vmem>>) attributes {dimension_semantics = [#tpu.dimension_semantics<parallel>], iteration_bounds = array<i64: 2>, scalar_prefetch = 0 : i64, scratch_operands = 1 : i64, tpu.core_type = #tpu.core_type<tc>, window_params = [{transform_indices = @transform_0, window_bounds = array<i64: 1, 4, 256>}, {pipeline_mode = #tpu.pipeline_mode<synchronous>, transform_indices = @transform_1, window_bounds = array<i64: 4, 36>}, {pipeline_mode = #tpu.pipeline_mode<synchronous>, transform_indices = @transform_2, window_bounds = array<i64: 4, 1>}, {transform_indices = @transform_3, window_bounds = array<i64: 1, 4, 256>}]} {
    %c0 = arith.constant 0 : index
    %c0_0 = arith.constant 0 : index
    %c0_1 = arith.constant 0 : index
    %0 = vector.load %arg1[%c0, %c0_0, %c0_1] : memref<1x4x256xf32, #tpu.memory_space<vmem>>, vector<1x4x256xf32>
    %1 = vector.shape_cast %0 : vector<1x4x256xf32> to vector<4x256xf32>
    %cst = arith.constant 0.000000e+00 : f32
    %2 = vector.broadcast %cst : f32 to vector<4x401xf32>
    %c0_2 = arith.constant 0 : index
    %c0_3 = arith.constant 0 : index
    %3 = vector.load %arg5[%c0_2, %c0_3] : memref<4x401xf32, #tpu.memory_space<vmem>>, vector<4x401xf32>
    tpu.vector_store %arg5[%c0_2, %c0_3], %2 {strides = array<i32>} : memref<4x401xf32, #tpu.memory_space<vmem>>, vector<4x401xf32>,
    %c0_4 = arith.constant 0 : index
    %c128 = arith.constant 128 : index
    %4 = vector.load %arg5[%c0_4, %c128] : memref<4x401xf32, #tpu.memory_space<vmem>>, vector<4x256xf32>
    tpu.vector_store %arg5[%c0_4, %c128], %1 {strides = array<i32>} : memref<4x401xf32, #tpu.memory_space<vmem>>, vector<4x256xf32>,
    %5 = tpu.iota {dimensions = array<i32: 1>} : vector<1x256xi32>
    %c16_i32 = arith.constant 16 : i32
    %c0_i32 = arith.constant 0 : i32
    %6 = arith.cmpi eq, %c16_i32, %c0_i32 : i32
    %c1_i32 = arith.constant 1 : i32
    %7 = arith.select %6, %c1_i32, %c16_i32 : i32
    %8 = vector.broadcast %7 : i32 to vector<1x256xi32>
    %9 = arith.remsi %5, %8 : vector<1x256xi32>
    %c0_i32_5 = arith.constant 0 : i32
    %10 = vector.broadcast %c0_i32_5 : i32 to vector<1x256xi32>
    %11 = arith.cmpi ne, %9, %10 : vector<1x256xi32>
    %c0_i32_6 = arith.constant 0 : i32
    %12 = vector.broadcast %c0_i32_6 : i32 to vector<1x256xi32>
    %13 = arith.cmpi slt, %9, %12 : vector<1x256xi32>
    %c0_i32_7 = arith.constant 0 : i32
    %14 = arith.cmpi slt, %7, %c0_i32_7 : i32
    %15 = vector.broadcast %14 : i1 to vector<1x256xi1>
    %16 = vector.broadcast %15 : vector<1x256xi1> to vector<1x256xi1>
    %17 = arith.xori %13, %16 : vector<1x256xi1>
    %18 = arith.andi %17, %11 : vector<1x256xi1>
    %19 = vector.broadcast %7 : i32 to vector<1x256xi32>
    %20 = arith.addi %9, %19 : vector<1x256xi32>
    %21 = arith.select %18, %20, %9 : vector<1x256xi1>, vector<1x256xi32>
    %c0_i32_8 = arith.constant 0 : i32
    %22 = vector.broadcast %c0_i32_8 : i32 to vector<1x256xi32>
    %23 = arith.cmpi ne, %21, %22 : vector<1x256xi32>
    %c15_i32 = arith.constant 15 : i32
    %24 = vector.broadcast %c15_i32 : i32 to vector<1x256xi32>
    %25 = arith.cmpi ne, %21, %24 : vector<1x256xi32>
    %c0_9 = arith.constant 0 : index
    %c0_10 = arith.constant 0 : index
    %26 = vector.load %arg2[%c0_9, %c0_10] : memref<4x36xf32, #tpu.memory_space<vmem>>, vector<4x36xf32>
    %cst_11 = arith.constant 0.000000e+00 : f32
    %27 = vector.broadcast %cst_11 : f32 to vector<4x256xf32>
    %c0_12 = arith.constant 0 : index
    %c111 = arith.constant 111 : index
    %28 = vector.load %arg5[%c0_12, %c111] : memref<4x401xf32, #tpu.memory_space<vmem>>, vector<4x256xf32>
    %cst_13 = arith.constant 0.000000e+00 : f32
    %29 = vector.shape_cast %23 : vector<1x256xi1> to vector<1x256xi1>
    %30 = vector.broadcast %29 : vector<1x256xi1> to vector<4x256xi1>
    %31 = vector.broadcast %cst_13 : f32 to vector<4x256xf32>
    %32 = arith.select %30, %28, %31 : vector<4x256xi1>, vector<4x256xf32>
    %33 = vector.extract_strided_slice %26 {offsets = [0, 0], sizes = [4, 1], strides = [1, 1]} : vector<4x36xf32> to vector<4x1xf32>
    %34 = vector.extract_strided_slice %32 {offsets = [0, 0], sizes = [1, 256], strides = [1, 1]} : vector<4x256xf32> to vector<1x256xf32>
    %35 = vector.broadcast %33 : vector<4x1xf32> to vector<4x256xf32>
    %36 = vector.broadcast %34 : vector<1x256xf32> to vector<4x256xf32>
    %37 = arith.mulf %35, %36 : vector<4x256xf32>
    %38 = arith.addf %27, %37 : vector<4x256xf32>
    %39 = vector.extract_strided_slice %26 {offsets = [0, 1], sizes = [4, 1], strides = [1, 1]} : vector<4x36xf32> to vector<4x1xf32>
    %40 = vector.extract_strided_slice %32 {offsets = [1, 0], sizes = [1, 256], strides = [1, 1]} : vector<4x256xf32> to vector<1x256xf32>
    %41 = vector.broadcast %39 : vector<4x1xf32> to vector<4x256xf32>
    %42 = vector.broadcast %40 : vector<1x256xf32> to vector<4x256xf32>
    %43 = arith.mulf %41, %42 : vector<4x256xf32>
    %44 = arith.addf %38, %43 : vector<4x256xf32>
    %45 = vector.extract_strided_slice %26 {offsets = [0, 2], sizes = [4, 1], strides = [1, 1]} : vector<4x36xf32> to vector<4x1xf32>
    %46 = vector.extract_strided_slice %32 {offsets = [2, 0], sizes = [1, 256], strides = [1, 1]} : vector<4x256xf32> to vector<1x256xf32>
    %47 = vector.broadcast %45 : vector<4x1xf32> to vector<4x256xf32>
    %48 = vector.broadcast %46 : vector<1x256xf32> to vector<4x256xf32>
    %49 = arith.mulf %47, %48 : vector<4x256xf32>
    %50 = arith.addf %44, %49 : vector<4x256xf32>
    %51 = vector.extract_strided_slice %26 {offsets = [0, 3], sizes = [4, 1], strides = [1, 1]} : vector<4x36xf32> to vector<4x1xf32>
    %52 = vector.extract_strided_slice %32 {offsets = [3, 0], sizes = [1, 256], strides = [1, 1]} : vector<4x256xf32> to vector<1x256xf32>
    %53 = vector.broadcast %51 : vector<4x1xf32> to vector<4x256xf32>
    %54 = vector.broadcast %52 : vector<1x256xf32> to vector<4x256xf32>
    %55 = arith.mulf %53, %54 : vector<4x256xf32>
    %56 = arith.addf %50, %55 : vector<4x256xf32>
    %c0_14 = arith.constant 0 : index
    %c112 = arith.constant 112 : index
    %57 = vector.load %arg5[%c0_14, %c112] : memref<4x401xf32, #tpu.memory_space<vmem>>, vector<4x256xf32>
    %58 = vector.extract_strided_slice %26 {offsets = [0, 4], sizes = [4, 1], strides = [1, 1]} : vector<4x36xf32> to vector<4x1xf32>
    %59 = vector.extract_strided_slice %57 {offsets = [0, 0], sizes = [1, 256], strides = [1, 1]} : vector<4x256xf32> to vector<1x256xf32>
    %60 = vector.broadcast %58 : vector<4x1xf32> to vector<4x256xf32>
    %61 = vector.broadcast %59 : vector<1x256xf32> to vector<4x256xf32>
    %62 = arith.mulf %60, %61 : vector<4x256xf32>
    %63 = arith.addf %56, %62 : vector<4x256xf32>
    %64 = vector.extract_strided_slice %26 {offsets = [0, 5], sizes = [4, 1], strides = [1, 1]} : vector<4x36xf32> to vector<4x1xf32>
    %65 = vector.extract_strided_slice %57 {offsets = [1, 0], sizes = [1, 256], strides = [1, 1]} : vector<4x256xf32> to vector<1x256xf32>
    %66 = vector.broadcast %64 : vector<4x1xf32> to vector<4x256xf32>
    %67 = vector.broadcast %65 : vector<1x256xf32> to vector<4x256xf32>
    %68 = arith.mulf %66, %67 : vector<4x256xf32>
    %69 = arith.addf %63, %68 : vector<4x256xf32>
    %70 = vector.extract_strided_slice %26 {offsets = [0, 6], sizes = [4, 1], strides = [1, 1]} : vector<4x36xf32> to vector<4x1xf32>
    %71 = vector.extract_strided_slice %57 {offsets = [2, 0], sizes = [1, 256], strides = [1, 1]} : vector<4x256xf32> to vector<1x256xf32>
    %72 = vector.broadcast %70 : vector<4x1xf32> to vector<4x256xf32>
    %73 = vector.broadcast %71 : vector<1x256xf32> to vector<4x256xf32>
    %74 = arith.mulf %72, %73 : vector<4x256xf32>
    %75 = arith.addf %69, %74 : vector<4x256xf32>
    %76 = vector.extract_strided_slice %26 {offsets = [0, 7], sizes = [4, 1], strides = [1, 1]} : vector<4x36xf32> to vector<4x1xf32>
    %77 = vector.extract_strided_slice %57 {offsets = [3, 0], sizes = [1, 256], strides = [1, 1]} : vector<4x256xf32> to vector<1x256xf32>
    %78 = vector.broadcast %76 : vector<4x1xf32> to vector<4x256xf32>
    %79 = vector.broadcast %77 : vector<1x256xf32> to vector<4x256xf32>
    %80 = arith.mulf %78, %79 : vector<4x256xf32>
    %81 = arith.addf %75, %80 : vector<4x256xf32>
    %c0_15 = arith.constant 0 : index
    %c113 = arith.constant 113 : index
    %82 = vector.load %arg5[%c0_15, %c113] : memref<4x401xf32, #tpu.memory_space<vmem>>, vector<4x256xf32>
    %cst_16 = arith.constant 0.000000e+00 : f32
    %83 = vector.shape_cast %25 : vector<1x256xi1> to vector<1x256xi1>
    %84 = vector.broadcast %83 : vector<1x256xi1> to vector<4x256xi1>
    %85 = vector.broadcast %cst_16 : f32 to vector<4x256xf32>
    %86 = arith.select %84, %82, %85 : vector<4x256xi1>, vector<4x256xf32>
    %87 = vector.extract_strided_slice %26 {offsets = [0, 8], sizes = [4, 1], strides = [1, 1]} : vector<4x36xf32> to vector<4x1xf32>
    %88 = vector.extract_strided_slice %86 {offsets = [0, 0], sizes = [1, 256], strides = [1, 1]} : vector<4x256xf32> to vector<1x256xf32>
    %89 = vector.broadcast %87 : vector<4x1xf32> to vector<4x256xf32>
    %90 = vector.broadcast %88 : vector<1x256xf32> to vector<4x256xf32>
    %91 = arith.mulf %89, %90 : vector<4x256xf32>
    %92 = arith.addf %81, %91 : vector<4x256xf32>
    %93 = vector.extract_strided_slice %26 {offsets = [0, 9], sizes = [4, 1], strides = [1, 1]} : vector<4x36xf32> to vector<4x1xf32>
    %94 = vector.extract_strided_slice %86 {offsets = [1, 0], sizes = [1, 256], strides = [1, 1]} : vector<4x256xf32> to vector<1x256xf32>
    %95 = vector.broadcast %93 : vector<4x1xf32> to vector<4x256xf32>
    %96 = vector.broadcast %94 : vector<1x256xf32> to vector<4x256xf32>
    %97 = arith.mulf %95, %96 : vector<4x256xf32>
    %98 = arith.addf %92, %97 : vector<4x256xf32>
    %99 = vector.extract_strided_slice %26 {offsets = [0, 10], sizes = [4, 1], strides = [1, 1]} : vector<4x36xf32> to vector<4x1xf32>
    %100 = vector.extract_strided_slice %86 {offsets = [2, 0], sizes = [1, 256], strides = [1, 1]} : vector<4x256xf32> to vector<1x256xf32>
    %101 = vector.broadcast %99 : vector<4x1xf32> to vector<4x256xf32>
    %102 = vector.broadcast %100 : vector<1x256xf32> to vector<4x256xf32>
    %103 = arith.mulf %101, %102 : vector<4x256xf32>
    %104 = arith.addf %98, %103 : vector<4x256xf32>
    %105 = vector.extract_strided_slice %26 {offsets = [0, 11], sizes = [4, 1], strides = [1, 1]} : vector<4x36xf32> to vector<4x1xf32>
    %106 = vector.extract_strided_slice %86 {offsets = [3, 0], sizes = [1, 256], strides = [1, 1]} : vector<4x256xf32> to vector<1x256xf32>
    %107 = vector.broadcast %105 : vector<4x1xf32> to vector<4x256xf32>
    %108 = vector.broadcast %106 : vector<1x256xf32> to vector<4x256xf32>
    %109 = arith.mulf %107, %108 : vector<4x256xf32>
    %110 = arith.addf %104, %109 : vector<4x256xf32>
    %c0_17 = arith.constant 0 : index
    %c127 = arith.constant 127 : index
    %111 = vector.load %arg5[%c0_17, %c127] : memref<4x401xf32, #tpu.memory_space<vmem>>, vector<4x256xf32>
    %cst_18 = arith.constant 0.000000e+00 : f32
    %112 = vector.shape_cast %23 : vector<1x256xi1> to vector<1x256xi1>
    %113 = vector.broadcast %112 : vector<1x256xi1> to vector<4x256xi1>
    %114 = vector.broadcast %cst_18 : f32 to vector<4x256xf32>
    %115 = arith.select %113, %111, %114 : vector<4x256xi1>, vector<4x256xf32>
    %116 = vector.extract_strided_slice %26 {offsets = [0, 12], sizes = [4, 1], strides = [1, 1]} : vector<4x36xf32> to vector<4x1xf32>
    %117 = vector.extract_strided_slice %115 {offsets = [0, 0], sizes = [1, 256], strides = [1, 1]} : vector<4x256xf32> to vector<1x256xf32>
    %118 = vector.broadcast %116 : vector<4x1xf32> to vector<4x256xf32>
    %119 = vector.broadcast %117 : vector<1x256xf32> to vector<4x256xf32>
    %120 = arith.mulf %118, %119 : vector<4x256xf32>
    %121 = arith.addf %110, %120 : vector<4x256xf32>
    %122 = vector.extract_strided_slice %26 {offsets = [0, 13], sizes = [4, 1], strides = [1, 1]} : vector<4x36xf32> to vector<4x1xf32>
    %123 = vector.extract_strided_slice %115 {offsets = [1, 0], sizes = [1, 256], strides = [1, 1]} : vector<4x256xf32> to vector<1x256xf32>
    %124 = vector.broadcast %122 : vector<4x1xf32> to vector<4x256xf32>
    %125 = vector.broadcast %123 : vector<1x256xf32> to vector<4x256xf32>
    %126 = arith.mulf %124, %125 : vector<4x256xf32>
    %127 = arith.addf %121, %126 : vector<4x256xf32>
    %128 = vector.extract_strided_slice %26 {offsets = [0, 14], sizes = [4, 1], strides = [1, 1]} : vector<4x36xf32> to vector<4x1xf32>
    %129 = vector.extract_strided_slice %115 {offsets = [2, 0], sizes = [1, 256], strides = [1, 1]} : vector<4x256xf32> to vector<1x256xf32>
    %130 = vector.broadcast %128 : vector<4x1xf32> to vector<4x256xf32>
    %131 = vector.broadcast %129 : vector<1x256xf32> to vector<4x256xf32>
    %132 = arith.mulf %130, %131 : vector<4x256xf32>
    %133 = arith.addf %127, %132 : vector<4x256xf32>
    %134 = vector.extract_strided_slice %26 {offsets = [0, 15], sizes = [4, 1], strides = [1, 1]} : vector<4x36xf32> to vector<4x1xf32>
    %135 = vector.extract_strided_slice %115 {offsets = [3, 0], sizes = [1, 256], strides = [1, 1]} : vector<4x256xf32> to vector<1x256xf32>
    %136 = vector.broadcast %134 : vector<4x1xf32> to vector<4x256xf32>
    %137 = vector.broadcast %135 : vector<1x256xf32> to vector<4x256xf32>
    %138 = arith.mulf %136, %137 : vector<4x256xf32>
    %139 = arith.addf %133, %138 : vector<4x256xf32>
    %c0_19 = arith.constant 0 : index
    %c128_20 = arith.constant 128 : index
    %140 = vector.load %arg5[%c0_19, %c128_20] : memref<4x401xf32, #tpu.memory_space<vmem>>, vector<4x256xf32>
    %141 = vector.extract_strided_slice %26 {offsets = [0, 16], sizes = [4, 1], strides = [1, 1]} : vector<4x36xf32> to vector<4x1xf32>
    %142 = vector.extract_strided_slice %140 {offsets = [0, 0], sizes = [1, 256], strides = [1, 1]} : vector<4x256xf32> to vector<1x256xf32>
    %143 = vector.broadcast %141 : vector<4x1xf32> to vector<4x256xf32>
    %144 = vector.broadcast %142 : vector<1x256xf32> to vector<4x256xf32>
    %145 = arith.mulf %143, %144 : vector<4x256xf32>
    %146 = arith.addf %139, %145 : vector<4x256xf32>
    %147 = vector.extract_strided_slice %26 {offsets = [0, 17], sizes = [4, 1], strides = [1, 1]} : vector<4x36xf32> to vector<4x1xf32>
    %148 = vector.extract_strided_slice %140 {offsets = [1, 0], sizes = [1, 256], strides = [1, 1]} : vector<4x256xf32> to vector<1x256xf32>
    %149 = vector.broadcast %147 : vector<4x1xf32> to vector<4x256xf32>
    %150 = vector.broadcast %148 : vector<1x256xf32> to vector<4x256xf32>
    %151 = arith.mulf %149, %150 : vector<4x256xf32>
    %152 = arith.addf %146, %151 : vector<4x256xf32>
    %153 = vector.extract_strided_slice %26 {offsets = [0, 18], sizes = [4, 1], strides = [1, 1]} : vector<4x36xf32> to vector<4x1xf32>
    %154 = vector.extract_strided_slice %140 {offsets = [2, 0], sizes = [1, 256], strides = [1, 1]} : vector<4x256xf32> to vector<1x256xf32>
    %155 = vector.broadcast %153 : vector<4x1xf32> to vector<4x256xf32>
    %156 = vector.broadcast %154 : vector<1x256xf32> to vector<4x256xf32>
    %157 = arith.mulf %155, %156 : vector<4x256xf32>
    %158 = arith.addf %152, %157 : vector<4x256xf32>
    %159 = vector.extract_strided_slice %26 {offsets = [0, 19], sizes = [4, 1], strides = [1, 1]} : vector<4x36xf32> to vector<4x1xf32>
    %160 = vector.extract_strided_slice %140 {offsets = [3, 0], sizes = [1, 256], strides = [1, 1]} : vector<4x256xf32> to vector<1x256xf32>
    %161 = vector.broadcast %159 : vector<4x1xf32> to vector<4x256xf32>
    %162 = vector.broadcast %160 : vector<1x256xf32> to vector<4x256xf32>
    %163 = arith.mulf %161, %162 : vector<4x256xf32>
    %164 = arith.addf %158, %163 : vector<4x256xf32>
    %c0_21 = arith.constant 0 : index
    %c129 = arith.constant 129 : index
    %165 = vector.load %arg5[%c0_21, %c129] : memref<4x401xf32, #tpu.memory_space<vmem>>, vector<4x256xf32>
    %cst_22 = arith.constant 0.000000e+00 : f32
    %166 = vector.shape_cast %25 : vector<1x256xi1> to vector<1x256xi1>
    %167 = vector.broadcast %166 : vector<1x256xi1> to vector<4x256xi1>
    %168 = vector.broadcast %cst_22 : f32 to vector<4x256xf32>
    %169 = arith.select %167, %165, %168 : vector<4x256xi1>, vector<4x256xf32>
    %170 = vector.extract_strided_slice %26 {offsets = [0, 20], sizes = [4, 1], strides = [1, 1]} : vector<4x36xf32> to vector<4x1xf32>
    %171 = vector.extract_strided_slice %169 {offsets = [0, 0], sizes = [1, 256], strides = [1, 1]} : vector<4x256xf32> to vector<1x256xf32>
    %172 = vector.broadcast %170 : vector<4x1xf32> to vector<4x256xf32>
    %173 = vector.broadcast %171 : vector<1x256xf32> to vector<4x256xf32>
    %174 = arith.mulf %172, %173 : vector<4x256xf32>
    %175 = arith.addf %164, %174 : vector<4x256xf32>
    %176 = vector.extract_strided_slice %26 {offsets = [0, 21], sizes = [4, 1], strides = [1, 1]} : vector<4x36xf32> to vector<4x1xf32>
    %177 = vector.extract_strided_slice %169 {offsets = [1, 0], sizes = [1, 256], strides = [1, 1]} : vector<4x256xf32> to vector<1x256xf32>
    %178 = vector.broadcast %176 : vector<4x1xf32> to vector<4x256xf32>
    %179 = vector.broadcast %177 : vector<1x256xf32> to vector<4x256xf32>
    %180 = arith.mulf %178, %179 : vector<4x256xf32>
    %181 = arith.addf %175, %180 : vector<4x256xf32>
    %182 = vector.extract_strided_slice %26 {offsets = [0, 22], sizes = [4, 1], strides = [1, 1]} : vector<4x36xf32> to vector<4x1xf32>
    %183 = vector.extract_strided_slice %169 {offsets = [2, 0], sizes = [1, 256], strides = [1, 1]} : vector<4x256xf32> to vector<1x256xf32>
    %184 = vector.broadcast %182 : vector<4x1xf32> to vector<4x256xf32>
    %185 = vector.broadcast %183 : vector<1x256xf32> to vector<4x256xf32>
    %186 = arith.mulf %184, %185 : vector<4x256xf32>
    %187 = arith.addf %181, %186 : vector<4x256xf32>
    %188 = vector.extract_strided_slice %26 {offsets = [0, 23], sizes = [4, 1], strides = [1, 1]} : vector<4x36xf32> to vector<4x1xf32>
    %189 = vector.extract_strided_slice %169 {offsets = [3, 0], sizes = [1, 256], strides = [1, 1]} : vector<4x256xf32> to vector<1x256xf32>
    %190 = vector.broadcast %188 : vector<4x1xf32> to vector<4x256xf32>
    %191 = vector.broadcast %189 : vector<1x256xf32> to vector<4x256xf32>
    %192 = arith.mulf %190, %191 : vector<4x256xf32>
    %193 = arith.addf %187, %192 : vector<4x256xf32>
    %c0_23 = arith.constant 0 : index
    %c143 = arith.constant 143 : index
    %194 = vector.load %arg5[%c0_23, %c143] : memref<4x401xf32, #tpu.memory_space<vmem>>, vector<4x256xf32>
    %cst_24 = arith.constant 0.000000e+00 : f32
    %195 = vector.shape_cast %23 : vector<1x256xi1> to vector<1x256xi1>
    %196 = vector.broadcast %195 : vector<1x256xi1> to vector<4x256xi1>
    %197 = vector.broadcast %cst_24 : f32 to vector<4x256xf32>
    %198 = arith.select %196, %194, %197 : vector<4x256xi1>, vector<4x256xf32>
    %199 = vector.extract_strided_slice %26 {offsets = [0, 24], sizes = [4, 1], strides = [1, 1]} : vector<4x36xf32> to vector<4x1xf32>
    %200 = vector.extract_strided_slice %198 {offsets = [0, 0], sizes = [1, 256], strides = [1, 1]} : vector<4x256xf32> to vector<1x256xf32>
    %201 = vector.broadcast %199 : vector<4x1xf32> to vector<4x256xf32>
    %202 = vector.broadcast %200 : vector<1x256xf32> to vector<4x256xf32>
    %203 = arith.mulf %201, %202 : vector<4x256xf32>
    %204 = arith.addf %193, %203 : vector<4x256xf32>
    %205 = vector.extract_strided_slice %26 {offsets = [0, 25], sizes = [4, 1], strides = [1, 1]} : vector<4x36xf32> to vector<4x1xf32>
    %206 = vector.extract_strided_slice %198 {offsets = [1, 0], sizes = [1, 256], strides = [1, 1]} : vector<4x256xf32> to vector<1x256xf32>
    %207 = vector.broadcast %205 : vector<4x1xf32> to vector<4x256xf32>
    %208 = vector.broadcast %206 : vector<1x256xf32> to vector<4x256xf32>
    %209 = arith.mulf %207, %208 : vector<4x256xf32>
    %210 = arith.addf %204, %209 : vector<4x256xf32>
    %211 = vector.extract_strided_slice %26 {offsets = [0, 26], sizes = [4, 1], strides = [1, 1]} : vector<4x36xf32> to vector<4x1xf32>
    %212 = vector.extract_strided_slice %198 {offsets = [2, 0], sizes = [1, 256], strides = [1, 1]} : vector<4x256xf32> to vector<1x256xf32>
    %213 = vector.broadcast %211 : vector<4x1xf32> to vector<4x256xf32>
    %214 = vector.broadcast %212 : vector<1x256xf32> to vector<4x256xf32>
    %215 = arith.mulf %213, %214 : vector<4x256xf32>
    %216 = arith.addf %210, %215 : vector<4x256xf32>
    %217 = vector.extract_strided_slice %26 {offsets = [0, 27], sizes = [4, 1], strides = [1, 1]} : vector<4x36xf32> to vector<4x1xf32>
    %218 = vector.extract_strided_slice %198 {offsets = [3, 0], sizes = [1, 256], strides = [1, 1]} : vector<4x256xf32> to vector<1x256xf32>
    %219 = vector.broadcast %217 : vector<4x1xf32> to vector<4x256xf32>
    %220 = vector.broadcast %218 : vector<1x256xf32> to vector<4x256xf32>
    %221 = arith.mulf %219, %220 : vector<4x256xf32>
    %222 = arith.addf %216, %221 : vector<4x256xf32>
    %c0_25 = arith.constant 0 : index
    %c144 = arith.constant 144 : index
    %223 = vector.load %arg5[%c0_25, %c144] : memref<4x401xf32, #tpu.memory_space<vmem>>, vector<4x256xf32>
    %224 = vector.extract_strided_slice %26 {offsets = [0, 28], sizes = [4, 1], strides = [1, 1]} : vector<4x36xf32> to vector<4x1xf32>
    %225 = vector.extract_strided_slice %223 {offsets = [0, 0], sizes = [1, 256], strides = [1, 1]} : vector<4x256xf32> to vector<1x256xf32>
    %226 = vector.broadcast %224 : vector<4x1xf32> to vector<4x256xf32>
    %227 = vector.broadcast %225 : vector<1x256xf32> to vector<4x256xf32>
    %228 = arith.mulf %226, %227 : vector<4x256xf32>
    %229 = arith.addf %222, %228 : vector<4x256xf32>
    %230 = vector.extract_strided_slice %26 {offsets = [0, 29], sizes = [4, 1], strides = [1, 1]} : vector<4x36xf32> to vector<4x1xf32>
    %231 = vector.extract_strided_slice %223 {offsets = [1, 0], sizes = [1, 256], strides = [1, 1]} : vector<4x256xf32> to vector<1x256xf32>
    %232 = vector.broadcast %230 : vector<4x1xf32> to vector<4x256xf32>
    %233 = vector.broadcast %231 : vector<1x256xf32> to vector<4x256xf32>
    %234 = arith.mulf %232, %233 : vector<4x256xf32>
    %235 = arith.addf %229, %234 : vector<4x256xf32>
    %236 = vector.extract_strided_slice %26 {offsets = [0, 30], sizes = [4, 1], strides = [1, 1]} : vector<4x36xf32> to vector<4x1xf32>
    %237 = vector.extract_strided_slice %223 {offsets = [2, 0], sizes = [1, 256], strides = [1, 1]} : vector<4x256xf32> to vector<1x256xf32>
    %238 = vector.broadcast %236 : vector<4x1xf32> to vector<4x256xf32>
    %239 = vector.broadcast %237 : vector<1x256xf32> to vector<4x256xf32>
    %240 = arith.mulf %238, %239 : vector<4x256xf32>
    %241 = arith.addf %235, %240 : vector<4x256xf32>
    %242 = vector.extract_strided_slice %26 {offsets = [0, 31], sizes = [4, 1], strides = [1, 1]} : vector<4x36xf32> to vector<4x1xf32>
    %243 = vector.extract_strided_slice %223 {offsets = [3, 0], sizes = [1, 256], strides = [1, 1]} : vector<4x256xf32> to vector<1x256xf32>
    %244 = vector.broadcast %242 : vector<4x1xf32> to vector<4x256xf32>
    %245 = vector.broadcast %243 : vector<1x256xf32> to vector<4x256xf32>
    %246 = arith.mulf %244, %245 : vector<4x256xf32>
    %247 = arith.addf %241, %246 : vector<4x256xf32>
    %c0_26 = arith.constant 0 : index
    %c145 = arith.constant 145 : index
    %248 = vector.load %arg5[%c0_26, %c145] : memref<4x401xf32, #tpu.memory_space<vmem>>, vector<4x256xf32>
    %cst_27 = arith.constant 0.000000e+00 : f32
    %249 = vector.shape_cast %25 : vector<1x256xi1> to vector<1x256xi1>
    %250 = vector.broadcast %249 : vector<1x256xi1> to vector<4x256xi1>
    %251 = vector.broadcast %cst_27 : f32 to vector<4x256xf32>
    %252 = arith.select %250, %248, %251 : vector<4x256xi1>, vector<4x256xf32>
    %253 = vector.extract_strided_slice %26 {offsets = [0, 32], sizes = [4, 1], strides = [1, 1]} : vector<4x36xf32> to vector<4x1xf32>
    %254 = vector.extract_strided_slice %252 {offsets = [0, 0], sizes = [1, 256], strides = [1, 1]} : vector<4x256xf32> to vector<1x256xf32>
    %255 = vector.broadcast %253 : vector<4x1xf32> to vector<4x256xf32>
    %256 = vector.broadcast %254 : vector<1x256xf32> to vector<4x256xf32>
    %257 = arith.mulf %255, %256 : vector<4x256xf32>
    %258 = arith.addf %247, %257 : vector<4x256xf32>
    %259 = vector.extract_strided_slice %26 {offsets = [0, 33], sizes = [4, 1], strides = [1, 1]} : vector<4x36xf32> to vector<4x1xf32>
    %260 = vector.extract_strided_slice %252 {offsets = [1, 0], sizes = [1, 256], strides = [1, 1]} : vector<4x256xf32> to vector<1x256xf32>
    %261 = vector.broadcast %259 : vector<4x1xf32> to vector<4x256xf32>
    %262 = vector.broadcast %260 : vector<1x256xf32> to vector<4x256xf32>
    %263 = arith.mulf %261, %262 : vector<4x256xf32>
    %264 = arith.addf %258, %263 : vector<4x256xf32>
    %265 = vector.extract_strided_slice %26 {offsets = [0, 34], sizes = [4, 1], strides = [1, 1]} : vector<4x36xf32> to vector<4x1xf32>
    %266 = vector.extract_strided_slice %252 {offsets = [2, 0], sizes = [1, 256], strides = [1, 1]} : vector<4x256xf32> to vector<1x256xf32>
    %267 = vector.broadcast %265 : vector<4x1xf32> to vector<4x256xf32>
    %268 = vector.broadcast %266 : vector<1x256xf32> to vector<4x256xf32>
    %269 = arith.mulf %267, %268 : vector<4x256xf32>
    %270 = arith.addf %264, %269 : vector<4x256xf32>
    %271 = vector.extract_strided_slice %26 {offsets = [0, 35], sizes = [4, 1], strides = [1, 1]} : vector<4x36xf32> to vector<4x1xf32>
    %272 = vector.extract_strided_slice %252 {offsets = [3, 0], sizes = [1, 256], strides = [1, 1]} : vector<4x256xf32> to vector<1x256xf32>
    %273 = vector.broadcast %271 : vector<4x1xf32> to vector<4x256xf32>
    %274 = vector.broadcast %272 : vector<1x256xf32> to vector<4x256xf32>
    %275 = arith.mulf %273, %274 : vector<4x256xf32>
    %276 = arith.addf %270, %275 : vector<4x256xf32>
    %c0_28 = arith.constant 0 : index
    %c0_29 = arith.constant 0 : index
    %277 = vector.load %arg3[%c0_28, %c0_29] : memref<4x1xf32, #tpu.memory_space<vmem>>, vector<4x1xf32>
    %278 = vector.broadcast %277 : vector<4x1xf32> to vector<4x256xf32>
    %279 = arith.addf %276, %278 : vector<4x256xf32>
    %280 = arith.addf %279, %1 : vector<4x256xf32>
    %cst_30 = arith.constant 0.000000e+00 : f32
    %281 = vector.broadcast %cst_30 : f32 to vector<4x256xf32>
    %282 = arith.maximumf %280, %281 : vector<4x256xf32>
    %c0_31 = arith.constant 0 : index
    %c0_32 = arith.constant 0 : index
    %c0_33 = arith.constant 0 : index
    %283 = vector.load %arg4[%c0_31, %c0_32, %c0_33] : memref<1x4x256xf32, #tpu.memory_space<vmem>>, vector<1x4x256xf32>
    %284 = vector.shape_cast %283 : vector<1x4x256xf32> to vector<4x256xf32>
    %285 = vector.shape_cast %282 : vector<4x256xf32> to vector<1x4x256xf32>
    tpu.vector_store %arg4[%c0_31, %c0_32, %c0_33], %285 {strides = array<i32>} : memref<1x4x256xf32, #tpu.memory_space<vmem>>, vector<1x4x256xf32>,
    return
  }
  func.func @transform_0(%arg0: i32) -> (i32, i32, i32) {
    %c0_i32 = arith.constant 0 : i32
    %c0_i32_0 = arith.constant 0 : i32
    %c0_i32_1 = arith.constant 0 : i32
    return %arg0, %c0_i32, %c0_i32_0 : i32, i32, i32
  }
  func.func @transform_1(%arg0: i32) -> (i32, i32) {
    %c0_i32 = arith.constant 0 : i32
    %c0_i32_0 = arith.constant 0 : i32
    %c0_i32_1 = arith.constant 0 : i32
    return %c0_i32, %c0_i32_0 : i32, i32
  }
  func.func @transform_2(%arg0: i32) -> (i32, i32) {
    %c0_i32 = arith.constant 0 : i32
    %c0_i32_0 = arith.constant 0 : i32
    %c0_i32_1 = arith.constant 0 : i32
    return %c0_i32, %c0_i32_0 : i32, i32
  }
  func.func @transform_3(%arg0: i32) -> (i32, i32, i32) {
    %c0_i32 = arith.constant 0 : i32
    %c0_i32_0 = arith.constant 0 : i32
    %c0_i32_1 = arith.constant 0 : i32
    return %arg0, %c0_i32, %c0_i32_0 : i32, i32, i32
  }
}

</mosaic_0001>

<llo_original>
// kernel: tpu_custom_call.1
$region0: #{tpu_custom_call.1}
  #allocation0 [shape = 'u32[]', space=smem, size = 0x4, offset = 0x4, fixed_abs, tag = 'smem constant byte address 0x4 - core index']
  #allocation1 [shape = 'u32[72,128]{1,0:T(1,128)}', space=vmem, size = 0x9000, scoped, tag = 'internal scratch']
  #allocation2 [shape = 'f32[4,401]{1,0:T(4,128)}', space=vmem, size = 0x2000, scoped, tag = 'scratch operand']
  %s0 = inlined_call_operand.hbm [shape: f32[2,4,256], index: 0, kind: input, shape index: {}]
  %s1 = inlined_call_operand.vmem [shape: f32[4,36], index: 1, kind: input, shape index: {}]
  %s2 = inlined_call_operand.vmem [shape: f32[4,1], index: 2, kind: input, shape index: {}]
  %s3 = inlined_call_operand.hbm [shape: f32[2,4,256], index: 3, kind: output, shape index: {}]
  %s4 = sld [smem:[#allocation0]]
  $region49: #{tpu_custom_call.1} parent=0
    _
  %s6 = ssub.s32 1, %s4
  %s7 = scalar_select 0, %s6, %s4
  $region1: #{tpu_custom_call.1} parent=0
    #allocation3 [shape = 'u8[8192]{0}', space=vmem, size = 0x2000, scoped, tag = 'input window, operand 0']
    #allocation4 [shape = 's32[2]{0}', space=sflag, size = 0x8, scoped, tag = 'scoped memory for tpu_custom_call.1']
    #allocation5 [shape = 's32[2]{0}', space=sflag, size = 0x8, scoped, tag = 'scoped memory for tpu_custom_call.1']
    #allocation6 [shape = 'u8[8192]{0}', space=vmem, size = 0x2000, scoped, tag = 'output window, operand 0']
    %8 = vsyncpa [#allocation4], 0
    %s9 = scalar_lea.sflag [#allocation4], 1
    %10 = vsyncpa %s9, 0
    %11 = vsyncpa [#allocation5], 0
    %s12 = scalar_lea.sflag [#allocation5], 1
    %13 = vsyncpa %s12, 0
    loop: start=0, step=1, limit=4
    $region2: #{tpu_custom_call.1} parent=1 // loop_pre_header
      _
    $region3: #{tpu_custom_call.1} parent=1 // loop_header
      %s15 = sphi 0, %s19
      %p16 = scmp.ge.s32.totalorder %s15, 4
      %s25 = sphi 0, %s27
      %s28 = sphi 0, %s25
      %s29 = sphi 0, %s28
      %s45 = sphi 0, %s29
      %s49 = sphi 0, %s49
      %s51 = sphi 0, %s49
      %s52 = sphi 0, %s51
      %s66 = sphi 0, %s52
      %s70 = sphi 0, %s70
      %s72 = sphi 0, %s70
      %s73 = sphi 0, %s72
      %s87 = sphi 0, %s73
      %s93 = sphi 0, %s95
      %s96 = sphi 0, %s93
      %s97 = sphi 0, %s96
      %s113 = sphi 0, %s97
    $region4: #{tpu_custom_call.1} parent=1 // loop_header_branch
      %18 = sbr.rel (%p16) target = $region8
    $region5: #{tpu_custom_call.1} parent=1 // loop_body
      %s20 = ssub.s32 %s15, 1
      %s21 = ssub.s32 %s15, 2
      %s22 = sadd.s32 %s15, 1
      %s23 = ssub.s32 %s15, %s22
      %p24 = scmp.eq.s32.totalorder %s23, 0
      %s26 = sadd.s32 %s25, 1
      %s27 = scalar_select %p24, %s25, %s26
      %p30 = pneg %p24
      %p31 = scmp.eq.s32.totalorder %s15, 1
      %p32 = por %p30, %p31
      %p33 = scmp.ne.s32.totalorder %s25, %s28
      %p34 = scmp.eq.s32.totalorder %s15, 0
      %p35 = por %p33, %p34
      %p36 = scmp.ne.s32.totalorder %s25, %s28
      %p37 = scmp.eq.s32.totalorder %s20, 1
      %p38 = por %p36, %p37
      %p39 = scmp.ne.s32.totalorder %s28, %s29
      %p40 = scmp.eq.s32.totalorder %s20, 0
      %p41 = por %p39, %p40
      %p42 = scmp.ne.s32.totalorder %s28, %s29
      %p43 = scmp.eq.s32.totalorder %s21, 1
      %p44 = por %p42, %p43
      %p46 = scmp.ne.s32.totalorder %s29, %s45
      %p47 = scmp.eq.s32.totalorder %s21, 0
      %p48 = por %p46, %p47
      %s50 = sadd.s32 %s49, 1
      %p53 = scmp.eq.s32.totalorder %s15, 1
      %p54 = scmp.ne.s32.totalorder %s49, %s51
      %p55 = scmp.eq.s32.totalorder %s15, 0
      %p56 = por %p54, %p55
      %p57 = scmp.ne.s32.totalorder %s49, %s51
      %p58 = scmp.eq.s32.totalorder %s20, 1
      %p59 = por %p57, %p58
      %p60 = scmp.ne.s32.totalorder %s51, %s52
      %p61 = scmp.eq.s32.totalorder %s20, 0
      %p62 = por %p60, %p61
      %p63 = scmp.ne.s32.totalorder %s51, %s52
      %p64 = scmp.eq.s32.totalorder %s21, 1
      %p65 = por %p63, %p64
      %p67 = scmp.ne.s32.totalorder %s52, %s66
      %p68 = scmp.eq.s32.totalorder %s21, 0
      %p69 = por %p67, %p68
      %s71 = sadd.s32 %s70, 1
      %p74 = scmp.eq.s32.totalorder %s15, 1
      %p75 = scmp.ne.s32.totalorder %s70, %s72
      %p76 = scmp.eq.s32.totalorder %s15, 0
      %p77 = por %p75, %p76
      %p78 = scmp.ne.s32.totalorder %s70, %s72
      %p79 = scmp.eq.s32.totalorder %s20, 1
      %p80 = por %p78, %p79
      %p81 = scmp.ne.s32.totalorder %s72, %s73
      %p82 = scmp.eq.s32.totalorder %s20, 0
      %p83 = por %p81, %p82
      %p84 = scmp.ne.s32.totalorder %s72, %s73
      %p85 = scmp.eq.s32.totalorder %s21, 1
      %p86 = por %p84, %p85
      %p88 = scmp.ne.s32.totalorder %s73, %s87
      %p89 = scmp.eq.s32.totalorder %s21, 0
      %p90 = por %p88, %p89
      %s91 = ssub.s32 %s15, %s22
      %p92 = scmp.eq.s32.totalorder %s91, 0
      %s94 = sadd.s32 %s93, 1
      %s95 = scalar_select %p92, %s93, %s94
      %p98 = pneg %p92
      %p99 = scmp.eq.s32.totalorder %s15, 1
      %p100 = por %p98, %p99
      %p101 = scmp.ne.s32.totalorder %s93, %s96
      %p102 = scmp.eq.s32.totalorder %s15, 0
      %p103 = por %p101, %p102
      %p104 = scmp.ne.s32.totalorder %s93, %s96
      %p105 = scmp.eq.s32.totalorder %s20, 1
      %p106 = por %p104, %p105
      %p107 = scmp.ne.s32.totalorder %s96, %s97
      %p108 = scmp.eq.s32.totalorder %s20, 0
      %p109 = por %p107, %p108
      %p110 = scmp.ne.s32.totalorder %s96, %s97
      %p111 = scmp.eq.s32.totalorder %s21, 1
      %p112 = por %p110, %p111
      %p114 = scmp.ne.s32.totalorder %s97, %s113
      %p115 = scmp.eq.s32.totalorder %s21, 0
      %p116 = por %p114, %p115
      %p117 = scmp.le.s32.totalorder 1, %s15
      %p118 = scmp.lt.s32.totalorder %s15, 3
      %p119 = pnand %p117, %p118
      %p120 = pneg %p119
      // Predicated region
      $region9: #{tpu_custom_call.1} parent=5 // pred_check
        _
      $region10: #{tpu_custom_call.1} parent=5 // pred_check_branch
        %122 = sbr.rel (%p119) target = $region12
      $region11: #{tpu_custom_call.1} parent=5 // pred_region
        %s123 = ssub.s32 %s15, 1
        // Predicated region
        $region13: #{tpu_custom_call.1} parent=11 // pred_check
          %p124 = pneg %p62
        $region14: #{tpu_custom_call.1} parent=11 // pred_check_branch
          %126 = sbr.rel (%p124) target = $region16
        $region15: #{tpu_custom_call.1} parent=11 // pred_region
          _
        $region16: #{tpu_custom_call.1} parent=11 // pred_fallthru
          _
        // Predicated region
        $region17: #{tpu_custom_call.1} parent=11 // pred_check
          %p127 = pneg %p83
        $region18: #{tpu_custom_call.1} parent=11 // pred_check_branch
          %129 = sbr.rel (%p127) target = $region20
        $region19: #{tpu_custom_call.1} parent=11 // pred_region
          _
        $region20: #{tpu_custom_call.1} parent=11 // pred_fallthru
          _
      $region12: #{tpu_custom_call.1} parent=5 // pred_fallthru
        _
      %p130 = scmp.lt.s32.totalorder %s15, 2
      // Predicated region
      $region21: #{tpu_custom_call.1} parent=5 // pred_check
        %p131 = pneg %p130
      $region22: #{tpu_custom_call.1} parent=5 // pred_check_branch
        %133 = sbr.rel (%p131) target = $region24
      $region23: #{tpu_custom_call.1} parent=5 // pred_region
        // Predicated region
        $region25: #{tpu_custom_call.1} parent=23 // pred_check
          %p134 = pneg %p35
        $region26: #{tpu_custom_call.1} parent=23 // pred_check_branch
          %136 = sbr.rel (%p134) target = $region28
        $region27: #{tpu_custom_call.1} parent=23 // pred_region
          %s137 = sand.u32 %s25, 1
          %s138 = scalar_lea.sflag [#allocation4], %s137
          %s139 = sand.u32 %s25, 1
          %s140 = smul.addr %s139, 8
          %s141 = scalar_lea.vmem [#allocation3], %s140
          %143 = vsyncadd %s138, 0
          %s144 = smul.addr %s15, 2
          %s145 = smul.addr %s144, 4
          %s146 = scalar_lea.hbm %s0, %s145
          %s148 = sshll.u32 %s146, 4
          %s149 = int_to_ptr.hbm [resolvable:$true] %s148
          %s150 = sshll.u32 %s141, 4
          %s151 = int_to_ptr.vmem [resolvable:$true] %s150
          %153 = dma.hbm_to_vmem [thread:$0]  %s149, 128, %s151, %s138
        $region28: #{tpu_custom_call.1} parent=23 // pred_fallthru
          _
      $region24: #{tpu_custom_call.1} parent=5 // pred_fallthru
        _
      %p154 = scmp.le.s32.totalorder 1, %s15
      %p155 = scmp.lt.s32.totalorder %s15, 3
      %p156 = pnand %p154, %p155
      %p157 = pneg %p156
      // Predicated region
      $region29: #{tpu_custom_call.1} parent=5 // pred_check
        _
      $region30: #{tpu_custom_call.1} parent=5 // pred_check_branch
        %159 = sbr.rel (%p156) target = $region32
      $region31: #{tpu_custom_call.1} parent=5 // pred_region
        %s160 = ssub.s32 %s15, 1
        %s161 = sand.u32 %s28, 1
        %s162 = scalar_lea.sflag [#allocation4], %s161
        %s163 = sand.u32 %s28, 1
        %s164 = smul.addr %s163, 8
        %s165 = scalar_lea.vmem [#allocation3], %s164
        // Predicated region
        $region33: #{tpu_custom_call.1} parent=31 // pred_check
          %p166 = pneg %p41
        $region34: #{tpu_custom_call.1} parent=31 // pred_check_branch
          %168 = sbr.rel (%p166) target = $region36
        $region35: #{tpu_custom_call.1} parent=31 // pred_region
          %170 = dma.done %s162, 128
        $region36: #{tpu_custom_call.1} parent=31 // pred_fallthru
          _
        %s171 = sand.u32 %s28, 1
        %s172 = scalar_lea.sflag [#allocation4], %s171
        %s173 = sand.u32 %s28, 1
        %s174 = smul.addr %s173, 8
        %s175 = scalar_lea.vmem [#allocation3], %s174
        %p176 = pneg %p41
        %p177 = pneg %p38
        %p178 = pneg %p62
        %p179 = pneg %p59
        %p180 = pneg %p83
        %p181 = pneg %p80
        %p182 = pneg %p109
        %p183 = pneg %p106
        %s184 = sand.u32 %s96, 1
        %s185 = scalar_lea.sflag [#allocation5], %s184
        %s186 = sand.u32 %s96, 1
        %s187 = smul.addr %s186, 8
        %s188 = scalar_lea.vmem [#allocation6], %s187
        %v189 = vld [vmem:[%s165] sm:$0xff]
        %190 = vst [vmem:[#allocation2] sm:$0xff] 0.0
        %vm191 = vcmask 1043456
        %vm192 = vcmask 138244
        %vm193 = vmor %vm192, %vm191
        %194 = vst.msk [vmem:[#allocation2 + $0x8] sm:$0xff] %vm193, 0.0
        %195 = vst [vmem:[#allocation2 + $0x4] sm:$0xff] %v189
        %v196 = vlaneseq
        %v197 = vand.u32 %v196, 127
        %v198 = vadd.s32 %v197, 128
        %vm199 = vcmp.lt.s32.totalorder %v197, 0
        %v200 = vsub.s32 0, %v197
        %v201 = vsel %vm199, %v200, %v197
        %v202 = vshrl.u32 %v201, 4
        %v203 = vand.u32 %v201, 15
        %v204 = vsub.s32 0, %v203
        %v205 = vsel %vm199, %v204, %v203
        %vm206 = vcmp.lt.s32.totalorder %v198, 0
        %v207 = vsub.s32 0, %v198
        %v208 = vsel %vm206, %v207, %v198
        %v209 = vshrl.u32 %v208, 4
        %v210 = vand.u32 %v208, 15
        %v211 = vsub.s32 0, %v210
        %v212 = vsel %vm206, %v211, %v210
        %vm213 = vcmp.ne.s32.totalorder %v205, 0
        %vm214 = vcmp.ne.s32.totalorder %v212, 0
        %vm215 = vcmp.lt.s32.totalorder %v205, 0
        %vm216 = vcmp.lt.s32.totalorder %v212, 0
        %vm217 = vmand %vm215, %vm213
        %vm218 = vmand %vm216, %vm214
        %v219 = vadd.s32 %v205, 16
        %v220 = vadd.s32 %v212, 16
        %v221 = vsel %vm217, %v219, %v205
        %v222 = vsel %vm218, %v220, %v212
        %vm223 = vcmp.ne.s32.totalorder %v221, 0
        %vm224 = vcmp.ne.s32.totalorder %v222, 0
        %vm225 = vcmp.ne.s32.totalorder %v221, 15
        %vm226 = vcmp.ne.s32.totalorder %v222, 15
        %v227 = vld [vmem:[%s1] sm:$0xf]
        %v228 = vld [vmem:[#allocation2] sm:$0xff]
        %v229 = vld [vmem:[#allocation2 + $0x8] sm:$0xf]
        %v230 = vsel %vm223, 1, 0
        %v231 = vsel %vm224, 1, 0
        %vm232 = vcmp.eq.s32.totalorder %v230, 1
        %vm233 = vcmp.eq.s32.totalorder %v231, 1
        %236 = vst [vmem:[#allocation1] ss:$2 sm:$0xff] %v228
        %s237 = scalar_lea.vmem [#allocation1], 16
        %238 = vst [vmem:[%s237] ss:$2 sm:$0xff] %v229
        %v239 = vld.sshfl [vmem:[#allocation1] sm:$0xff pattern:$0x75316420]
        %v240 = vld.sshfl [vmem:[#allocation1 + $0x8] sm:$0xff pattern:$0x75316420]
        %v241 = vld.sshfl [vmem:[#allocation1 + $0x10] sm:$0xff pattern:$0x75316420]
        %242 = vrot.lane.b32.xlu0 %v239, 17
        %v243 = vpop.permute.xlu0 %242
        %244 = vrot.lane.b32.xlu0 %v240, 17
        %v245 = vpop.permute.xlu0 %244
        %246 = vrot.lane.b32.xlu0 %v241, 17
        %v247 = vpop.permute.xlu0 %246
        %vm248 = vcmask 138240
        %v249 = vsel %vm248, %v243, %v245
        %v250 = vsel %vm248, %v245, %v247
        %v253 = vsel %vm232, %v249, 0.0
        %v254 = vsel %vm233, %v250, 0.0
        %256 = vset.pattern.permute.xlu0 0
        %257 = vperm.xlu0 %256, %v227
        %v258 = vpop.permute.xlu0 %257
        %v260 = vperm.slane %v253, 0
        %v261 = vperm.slane %v254, 0
        %v262 = vmul.f32 %v258, %v260
        %v263 = vmul.f32 %v258, %v261
        %v264 = vadd.f32 %v262, 0.0
        %v265 = vadd.f32 %v263, 0.0
        %266 = vset.pattern.permute.xlu0 1
        %267 = vperm.xlu0 %266, %v227
        %v268 = vpop.permute.xlu0 %267
        %v270 = vperm.slane %v253, 1
        %v271 = vperm.slane %v254, 1
        %v272 = vmul.f32 %v268, %v270
        %v273 = vmul.f32 %v268, %v271
        %v274 = vadd.f32 %v264, %v272
        %v275 = vadd.f32 %v265, %v273
        %276 = vset.pattern.permute.xlu0 2
        %277 = vperm.xlu0 %276, %v227
        %v278 = vpop.permute.xlu0 %277
        %v280 = vperm.slane %v253, 2
        %v281 = vperm.slane %v254, 2
        %v282 = vmul.f32 %v278, %v280
        %v283 = vmul.f32 %v278, %v281
        %v284 = vadd.f32 %v274, %v282
        %v285 = vadd.f32 %v275, %v283
        %286 = vset.pattern.permute.xlu0 3
        %287 = vperm.xlu0 %286, %v227
        %v288 = vpop.permute.xlu0 %287
        %v290 = vperm.slane %v253, 3
        %v291 = vperm.slane %v254, 3
        %v292 = vmul.f32 %v288, %v290
        %v293 = vmul.f32 %v288, %v291
        %v294 = vadd.f32 %v284, %v292
        %v295 = vadd.f32 %v285, %v293
        %v296 = vld [vmem:[#allocation2] sm:$0xff]
        %v297 = vld [vmem:[#allocation2 + $0x8] sm:$0xf]
        %298 = vset.pattern.permute.xlu0 4
        %299 = vperm.xlu0 %298, %v227
        %v300 = vpop.permute.xlu0 %299
        %v304 = vperm.slane %v296, 0
        %v305 = vperm.slane %v296, 4
        %v306 = vperm.slane %v297, 0
        %v310 = vperm.slane %v304, 0
        %v311 = vperm.slane %v305, 0
        %v312 = vperm.slane %v306, 0
        %v313 = vmul.f32 %v300, %v310
        %v314 = vmul.f32 %v300, %v311
        %v315 = vmul.f32 %v300, %v312
        %319 = vrot.lane.b32.xlu0 %v313, 16
        %v320 = vpop.permute.xlu0 %319
        %321 = vrot.lane.b32.xlu0 %v314, 16
        %v322 = vpop.permute.xlu0 %321
        %323 = vrot.lane.b32.xlu0 %v315, 16
        %v324 = vpop.permute.xlu0 %323
        %vm325 = vcmask 130048
        %v326 = vsel %vm325, %v320, %v322
        %v327 = vsel %vm325, %v322, %v324
        %v330 = vadd.f32 %v294, %v326
        %v331 = vadd.f32 %v295, %v327
        %332 = vset.pattern.permute.xlu0 5
        %333 = vperm.xlu0 %332, %v227
        %v334 = vpop.permute.xlu0 %333
        %v336 = vperm.slane %v296, 1
        %v337 = vperm.slane %v296, 5
        %v338 = vperm.slane %v297, 1
        %v342 = vperm.slane %v336, 1
        %v343 = vperm.slane %v337, 1
        %v344 = vperm.slane %v338, 1
        %v345 = vmul.f32 %v334, %v342
        %v346 = vmul.f32 %v334, %v343
        %v347 = vmul.f32 %v334, %v344
        %351 = vrot.lane.b32.xlu0 %v345, 16
        %v352 = vpop.permute.xlu0 %351
        %353 = vrot.lane.b32.xlu0 %v346, 16
        %v354 = vpop.permute.xlu0 %353
        %355 = vrot.lane.b32.xlu0 %v347, 16
        %v356 = vpop.permute.xlu0 %355
        %v357 = vsel %vm325, %v352, %v354
        %v358 = vsel %vm325, %v354, %v356
        %v361 = vadd.f32 %v330, %v357
        %v362 = vadd.f32 %v331, %v358
        %363 = vset.pattern.permute.xlu0 6
        %364 = vperm.xlu0 %363, %v227
        %v365 = vpop.permute.xlu0 %364
        %v367 = vperm.slane %v296, 2
        %v368 = vperm.slane %v296, 6
        %v369 = vperm.slane %v297, 2
        %v373 = vperm.slane %v367, 2
        %v374 = vperm.slane %v368, 2
        %v375 = vperm.slane %v369, 2
        %v376 = vmul.f32 %v365, %v373
        %v377 = vmul.f32 %v365, %v374
        %v378 = vmul.f32 %v365, %v375
        %382 = vrot.lane.b32.xlu0 %v376, 16
        %v383 = vpop.permute.xlu0 %382
        %384 = vrot.lane.b32.xlu0 %v377, 16
        %v385 = vpop.permute.xlu0 %384
        %386 = vrot.lane.b32.xlu0 %v378, 16
        %v387 = vpop.permute.xlu0 %386
        %v388 = vsel %vm325, %v383, %v385
        %v389 = vsel %vm325, %v385, %v387
        %v392 = vadd.f32 %v361, %v388
        %v393 = vadd.f32 %v362, %v389
        %394 = vset.pattern.permute.xlu0 7
        %395 = vperm.xlu0 %394, %v227
        %v396 = vpop.permute.xlu0 %395
        %v398 = vperm.slane %v296, 3
        %v399 = vperm.slane %v296, 7
        %v400 = vperm.slane %v297, 3
        %v404 = vperm.slane %v398, 3
        %v405 = vperm.slane %v399, 3
        %v406 = vperm.slane %v400, 3
        %v407 = vmul.f32 %v396, %v404
        %v408 = vmul.f32 %v396, %v405
        %v409 = vmul.f32 %v396, %v406
        %413 = vrot.lane.b32.xlu0 %v407, 16
        %v414 = vpop.permute.xlu0 %413
        %415 = vrot.lane.b32.xlu0 %v408, 16
        %v416 = vpop.permute.xlu0 %415
        %417 = vrot.lane.b32.xlu0 %v409, 16
        %v418 = vpop.permute.xlu0 %417
        %v419 = vsel %vm325, %v414, %v416
        %v420 = vsel %vm325, %v416, %v418
        %v423 = vadd.f32 %v392, %v419
        %v424 = vadd.f32 %v393, %v420
        %v425 = vsel %vm225, 1, 0
        %v426 = vsel %vm226, 1, 0
        %vm427 = vcmp.eq.s32.totalorder %v425, 1
        %vm428 = vcmp.eq.s32.totalorder %v426, 1
        %429 = vst [vmem:[#allocation1] ss:$2 sm:$0xff] %v296
        %s430 = scalar_lea.vmem [#allocation1], 16
        %431 = vst [vmem:[%s430] ss:$2 sm:$0xff] %v297
        %v432 = vld.sshfl [vmem:[#allocation1] sm:$0xff pattern:$0x75316420]
        %v433 = vld.sshfl [vmem:[#allocation1 + $0x8] sm:$0xff pattern:$0x75316420]
        %v434 = vld.sshfl [vmem:[#allocation1 + $0x10] sm:$0xff pattern:$0x75316420]
        %435 = vrot.lane.b32.xlu0 %v432, 15
        %v436 = vpop.permute.xlu0 %435
        %437 = vrot.lane.b32.xlu0 %v433, 15
        %v438 = vpop.permute.xlu0 %437
        %439 = vrot.lane.b32.xlu0 %v434, 15
        %v440 = vpop.permute.xlu0 %439
        %vm441 = vcmask 121856
        %v442 = vsel %vm441, %v436, %v438
        %v443 = vsel %vm441, %v438, %v440
        %v446 = vsel %vm427, %v442, 0.0
        %v447 = vsel %vm428, %v443, 0.0
        %448 = vset.pattern.permute.xlu0 8
        %449 = vperm.xlu0 %448, %v227
        %v450 = vpop.permute.xlu0 %449
        %v452 = vperm.slane %v446, 0
        %v453 = vperm.slane %v447, 0
        %v454 = vmul.f32 %v450, %v452
        %v455 = vmul.f32 %v450, %v453
        %v456 = vadd.f32 %v423, %v454
        %v457 = vadd.f32 %v424, %v455
        %458 = vset.pattern.permute.xlu0 9
        %459 = vperm.xlu0 %458, %v227
        %v460 = vpop.permute.xlu0 %459
        %v462 = vperm.slane %v446, 1
        %v463 = vperm.slane %v447, 1
        %v464 = vmul.f32 %v460, %v462
        %v465 = vmul.f32 %v460, %v463
        %v466 = vadd.f32 %v456, %v464
        %v467 = vadd.f32 %v457, %v465
        %468 = vset.pattern.permute.xlu0 10
        %469 = vperm.xlu0 %468, %v227
        %v470 = vpop.permute.xlu0 %469
        %v472 = vperm.slane %v446, 2
        %v473 = vperm.slane %v447, 2
        %v474 = vmul.f32 %v470, %v472
        %v475 = vmul.f32 %v470, %v473
        %v476 = vadd.f32 %v466, %v474
        %v477 = vadd.f32 %v467, %v475
        %478 = vset.pattern.permute.xlu0 11
        %479 = vperm.xlu0 %478, %v227
        %v480 = vpop.permute.xlu0 %479
        %v482 = vperm.slane %v446, 3
        %v483 = vperm.slane %v447, 3
        %v484 = vmul.f32 %v480, %v482
        %v485 = vmul.f32 %v480, %v483
        %v486 = vadd.f32 %v476, %v484
        %v487 = vadd.f32 %v477, %v485
        %v488 = vld [vmem:[#allocation2] sm:$0xff]
        %v489 = vld [vmem:[#allocation2 + $0x8] sm:$0xf]
        %492 = vst [vmem:[#allocation1] ss:$2 sm:$0xff] %v488
        %s493 = scalar_lea.vmem [#allocation1], 16
        %494 = vst [vmem:[%s493] ss:$2 sm:$0xff] %v489
        %v495 = vld.sshfl [vmem:[#allocation1] sm:$0xff pattern:$0x75316420]
        %v496 = vld.sshfl [vmem:[#allocation1 + $0x8] sm:$0xff pattern:$0x75316420]
        %v497 = vld.sshfl [vmem:[#allocation1 + $0x10] sm:$0xff pattern:$0x75316420]
        %498 = vrot.lane.b32.xlu0 %v495, 1
        %v499 = vpop.permute.xlu0 %498
        %500 = vrot.lane.b32.xlu0 %v496, 1
        %v501 = vpop.permute.xlu0 %500
        %502 = vrot.lane.b32.xlu0 %v497, 1
        %v503 = vpop.permute.xlu0 %502
        %vm504 = vcmask 7168
        %v505 = vsel %vm504, %v499, %v501
        %v506 = vsel %vm504, %v501, %v503
        %v509 = vsel %vm232, %v505, 0.0
        %v510 = vsel %vm233, %v506, 0.0
        %511 = vset.pattern.permute.xlu0 12
        %512 = vperm.xlu0 %511, %v227
        %v513 = vpop.permute.xlu0 %512
        %v515 = vperm.slane %v509, 0
        %v516 = vperm.slane %v510, 0
        %v517 = vmul.f32 %v513, %v515
        %v518 = vmul.f32 %v513, %v516
        %v519 = vadd.f32 %v486, %v517
        %v520 = vadd.f32 %v487, %v518
        %521 = vset.pattern.permute.xlu0 13
        %522 = vperm.xlu0 %521, %v227
        %v523 = vpop.permute.xlu0 %522
        %v525 = vperm.slane %v509, 1
        %v526 = vperm.slane %v510, 1
        %v527 = vmul.f32 %v523, %v525
        %v528 = vmul.f32 %v523, %v526
        %v529 = vadd.f32 %v519, %v527
        %v530 = vadd.f32 %v520, %v528
        %531 = vset.pattern.permute.xlu0 14
        %532 = vperm.xlu0 %531, %v227
        %v533 = vpop.permute.xlu0 %532
        %v535 = vperm.slane %v509, 2
        %v536 = vperm.slane %v510, 2
        %v537 = vmul.f32 %v533, %v535
        %v538 = vmul.f32 %v533, %v536
        %v539 = vadd.f32 %v529, %v537
        %v540 = vadd.f32 %v530, %v538
        %541 = vset.pattern.permute.xlu0 15
        %542 = vperm.xlu0 %541, %v227
        %v543 = vpop.permute.xlu0 %542
        %v545 = vperm.slane %v509, 3
        %v546 = vperm.slane %v510, 3
        %v547 = vmul.f32 %v543, %v545
        %v548 = vmul.f32 %v543, %v546
        %v549 = vadd.f32 %v539, %v547
        %v550 = vadd.f32 %v540, %v548
        %v551 = vld [vmem:[#allocation2 + $0x4] sm:$0xff]
        %552 = vset.pattern.permute.xlu0 16
        %553 = vperm.xlu0 %552, %v227
        %v554 = vpop.permute.xlu0 %553
        %v557 = vperm.slane %v551, 0
        %v558 = vperm.slane %v551, 4
        %v561 = vperm.slane %v557, 0
        %v562 = vperm.slane %v558, 0
        %v563 = vmul.f32 %v554, %v561
        %v564 = vmul.f32 %v554, %v562
        %v565 = vadd.f32 %v549, %v563
        %v566 = vadd.f32 %v550, %v564
        %567 = vset.pattern.permute.xlu0 17
        %568 = vperm.xlu0 %567, %v227
        %v569 = vpop.permute.xlu0 %568
        %v571 = vperm.slane %v551, 1
        %v572 = vperm.slane %v551, 5
        %v575 = vperm.slane %v571, 1
        %v576 = vperm.slane %v572, 1
        %v577 = vmul.f32 %v569, %v575
        %v578 = vmul.f32 %v569, %v576
        %v579 = vadd.f32 %v565, %v577
        %v580 = vadd.f32 %v566, %v578
        %581 = vset.pattern.permute.xlu0 18
        %582 = vperm.xlu0 %581, %v227
        %v583 = vpop.permute.xlu0 %582
        %v585 = vperm.slane %v551, 2
        %v586 = vperm.slane %v551, 6
        %v589 = vperm.slane %v585, 2
        %v590 = vperm.slane %v586, 2
        %v591 = vmul.f32 %v583, %v589
        %v592 = vmul.f32 %v583, %v590
        %v593 = vadd.f32 %v579, %v591
        %v594 = vadd.f32 %v580, %v592
        %595 = vset.pattern.permute.xlu0 19
        %596 = vperm.xlu0 %595, %v227
        %v597 = vpop.permute.xlu0 %596
        %v599 = vperm.slane %v551, 3
        %v600 = vperm.slane %v551, 7
        %v603 = vperm.slane %v599, 3
        %v604 = vperm.slane %v600, 3
        %v605 = vmul.f32 %v597, %v603
        %v606 = vmul.f32 %v597, %v604
        %v607 = vadd.f32 %v593, %v605
        %v608 = vadd.f32 %v594, %v606
        %v609 = vld [vmem:[#allocation2 + $0x4] sm:$0xff]
        %v610 = vld [vmem:[#allocation2 + $0xc] sm:$0xf]
        %613 = vst [vmem:[#allocation1] ss:$2 sm:$0xff] %v609
        %s614 = scalar_lea.vmem [#allocation1], 16
        %615 = vst [vmem:[%s614] ss:$2 sm:$0xff] %v610
        %v616 = vld.sshfl [vmem:[#allocation1] sm:$0xff pattern:$0x75316420]
        %v617 = vld.sshfl [vmem:[#allocation1 + $0x8] sm:$0xff pattern:$0x75316420]
        %v618 = vld.sshfl [vmem:[#allocation1 + $0x10] sm:$0xff pattern:$0x75316420]
        %619 = vrot.lane.b32.xlu0 %v616, 127
        %v620 = vpop.permute.xlu0 %619
        %621 = vrot.lane.b32.xlu0 %v617, 127
        %v622 = vpop.permute.xlu0 %621
        %623 = vrot.lane.b32.xlu0 %v618, 127
        %v624 = vpop.permute.xlu0 %623
        %vm625 = vcmask 1039360
        %v626 = vsel %vm625, %v620, %v622
        %v627 = vsel %vm625, %v622, %v624
        %v630 = vsel %vm427, %v626, 0.0
        %v631 = vsel %vm428, %v627, 0.0
        %632 = vset.pattern.permute.xlu0 20
        %633 = vperm.xlu0 %632, %v227
        %v634 = vpop.permute.xlu0 %633
        %v636 = vperm.slane %v630, 0
        %v637 = vperm.slane %v631, 0
        %v638 = vmul.f32 %v634, %v636
        %v639 = vmul.f32 %v634, %v637
        %v640 = vadd.f32 %v607, %v638
        %v641 = vadd.f32 %v608, %v639
        %642 = vset.pattern.permute.xlu0 21
        %643 = vperm.xlu0 %642, %v227
        %v644 = vpop.permute.xlu0 %643
        %v646 = vperm.slane %v630, 1
        %v647 = vperm.slane %v631, 1
        %v648 = vmul.f32 %v644, %v646
        %v649 = vmul.f32 %v644, %v647
        %v650 = vadd.f32 %v640, %v648
        %v651 = vadd.f32 %v641, %v649
        %652 = vset.pattern.permute.xlu0 22
        %653 = vperm.xlu0 %652, %v227
        %v654 = vpop.permute.xlu0 %653
        %v656 = vperm.slane %v630, 2
        %v657 = vperm.slane %v631, 2
        %v658 = vmul.f32 %v654, %v656
        %v659 = vmul.f32 %v654, %v657
        %v660 = vadd.f32 %v650, %v658
        %v661 = vadd.f32 %v651, %v659
        %662 = vset.pattern.permute.xlu0 23
        %663 = vperm.xlu0 %662, %v227
        %v664 = vpop.permute.xlu0 %663
        %v666 = vperm.slane %v630, 3
        %v667 = vperm.slane %v631, 3
        %v668 = vmul.f32 %v664, %v666
        %v669 = vmul.f32 %v664, %v667
        %v670 = vadd.f32 %v660, %v668
        %v671 = vadd.f32 %v661, %v669
        %v672 = vld [vmem:[#allocation2 + $0x4] sm:$0xff]
        %v673 = vld [vmem:[#allocation2 + $0xc] sm:$0xf]
        %676 = vst [vmem:[#allocation1] ss:$2 sm:$0xff] %v672
        %s677 = scalar_lea.vmem [#allocation1], 16
        %678 = vst [vmem:[%s677] ss:$2 sm:$0xff] %v673
        %v679 = vld.sshfl [vmem:[#allocation1] sm:$0xff pattern:$0x75316420]
        %v680 = vld.sshfl [vmem:[#allocation1 + $0x8] sm:$0xff pattern:$0x75316420]
        %v681 = vld.sshfl [vmem:[#allocation1 + $0x10] sm:$0xff pattern:$0x75316420]
        %682 = vrot.lane.b32.xlu0 %v679, 113
        %v683 = vpop.permute.xlu0 %682
        %684 = vrot.lane.b32.xlu0 %v680, 113
        %v685 = vpop.permute.xlu0 %684
        %686 = vrot.lane.b32.xlu0 %v681, 113
        %v687 = vpop.permute.xlu0 %686
        %vm688 = vcmask 924672
        %v689 = vsel %vm688, %v683, %v685
        %v690 = vsel %vm688, %v685, %v687
        %v693 = vsel %vm232, %v689, 0.0
        %v694 = vsel %vm233, %v690, 0.0
        %695 = vset.pattern.permute.xlu0 24
        %696 = vperm.xlu0 %695, %v227
        %v697 = vpop.permute.xlu0 %696
        %v699 = vperm.slane %v693, 0
        %v700 = vperm.slane %v694, 0
        %v701 = vmul.f32 %v697, %v699
        %v702 = vmul.f32 %v697, %v700
        %v703 = vadd.f32 %v670, %v701
        %v704 = vadd.f32 %v671, %v702
        %705 = vset.pattern.permute.xlu0 25
        %706 = vperm.xlu0 %705, %v227
        %v707 = vpop.permute.xlu0 %706
        %v709 = vperm.slane %v693, 1
        %v710 = vperm.slane %v694, 1
        %v711 = vmul.f32 %v707, %v709
        %v712 = vmul.f32 %v707, %v710
        %v713 = vadd.f32 %v703, %v711
        %v714 = vadd.f32 %v704, %v712
        %715 = vset.pattern.permute.xlu0 26
        %716 = vperm.xlu0 %715, %v227
        %v717 = vpop.permute.xlu0 %716
        %v719 = vperm.slane %v693, 2
        %v720 = vperm.slane %v694, 2
        %v721 = vmul.f32 %v717, %v719
        %v722 = vmul.f32 %v717, %v720
        %v723 = vadd.f32 %v713, %v721
        %v724 = vadd.f32 %v714, %v722
        %725 = vset.pattern.permute.xlu0 27
        %726 = vperm.xlu0 %725, %v227
        %v727 = vpop.permute.xlu0 %726
        %v729 = vperm.slane %v693, 3
        %v730 = vperm.slane %v694, 3
        %v731 = vmul.f32 %v727, %v729
        %v732 = vmul.f32 %v727, %v730
        %v733 = vadd.f32 %v723, %v731
        %v734 = vadd.f32 %v724, %v732
        %v735 = vld [vmem:[#allocation2 + $0x4] sm:$0xff]
        %v736 = vld [vmem:[#allocation2 + $0xc] sm:$0xf]
        %737 = vset.pattern.permute.xlu0 28
        %738 = vperm.xlu0 %737, %v227
        %v739 = vpop.permute.xlu0 %738
        %v743 = vperm.slane %v735, 0
        %v744 = vperm.slane %v735, 4
        %v745 = vperm.slane %v736, 0
        %v749 = vperm.slane %v743, 0
        %v750 = vperm.slane %v744, 0
        %v751 = vperm.slane %v745, 0
        %v752 = vmul.f32 %v739, %v749
        %v753 = vmul.f32 %v739, %v750
        %v754 = vmul.f32 %v739, %v751
        %758 = vrot.lane.b32.xlu0 %v752, 112
        %v759 = vpop.permute.xlu0 %758
        %760 = vrot.lane.b32.xlu0 %v753, 112
        %v761 = vpop.permute.xlu0 %760
        %762 = vrot.lane.b32.xlu0 %v754, 112
        %v763 = vpop.permute.xlu0 %762
        %vm764 = vcmask 916480
        %v765 = vsel %vm764, %v759, %v761
        %v766 = vsel %vm764, %v761, %v763
        %v769 = vadd.f32 %v733, %v765
        %v770 = vadd.f32 %v734, %v766
        %771 = vset.pattern.permute.xlu0 29
        %772 = vperm.xlu0 %771, %v227
        %v773 = vpop.permute.xlu0 %772
        %v775 = vperm.slane %v735, 1
        %v776 = vperm.slane %v735, 5
        %v777 = vperm.slane %v736, 1
        %v781 = vperm.slane %v775, 1
        %v782 = vperm.slane %v776, 1
        %v783 = vperm.slane %v777, 1
        %v784 = vmul.f32 %v773, %v781
        %v785 = vmul.f32 %v773, %v782
        %v786 = vmul.f32 %v773, %v783
        %790 = vrot.lane.b32.xlu0 %v784, 112
        %v791 = vpop.permute.xlu0 %790
        %792 = vrot.lane.b32.xlu0 %v785, 112
        %v793 = vpop.permute.xlu0 %792
        %794 = vrot.lane.b32.xlu0 %v786, 112
        %v795 = vpop.permute.xlu0 %794
        %v796 = vsel %vm764, %v791, %v793
        %v797 = vsel %vm764, %v793, %v795
        %v800 = vadd.f32 %v769, %v796
        %v801 = vadd.f32 %v770, %v797
        %802 = vset.pattern.permute.xlu0 30
        %803 = vperm.xlu0 %802, %v227
        %v804 = vpop.permute.xlu0 %803
        %v806 = vperm.slane %v735, 2
        %v807 = vperm.slane %v735, 6
        %v808 = vperm.slane %v736, 2
        %v812 = vperm.slane %v806, 2
        %v813 = vperm.slane %v807, 2
        %v814 = vperm.slane %v808, 2
        %v815 = vmul.f32 %v804, %v812
        %v816 = vmul.f32 %v804, %v813
        %v817 = vmul.f32 %v804, %v814
        %821 = vrot.lane.b32.xlu0 %v815, 112
        %v822 = vpop.permute.xlu0 %821
        %823 = vrot.lane.b32.xlu0 %v816, 112
        %v824 = vpop.permute.xlu0 %823
        %825 = vrot.lane.b32.xlu0 %v817, 112
        %v826 = vpop.permute.xlu0 %825
        %v827 = vsel %vm764, %v822, %v824
        %v828 = vsel %vm764, %v824, %v826
        %v831 = vadd.f32 %v800, %v827
        %v832 = vadd.f32 %v801, %v828
        %833 = vset.pattern.permute.xlu0 31
        %834 = vperm.xlu0 %833, %v227
        %v835 = vpop.permute.xlu0 %834
        %v837 = vperm.slane %v735, 3
        %v838 = vperm.slane %v735, 7
        %v839 = vperm.slane %v736, 3
        %v843 = vperm.slane %v837, 3
        %v844 = vperm.slane %v838, 3
        %v845 = vperm.slane %v839, 3
        %v846 = vmul.f32 %v835, %v843
        %v847 = vmul.f32 %v835, %v844
        %v848 = vmul.f32 %v835, %v845
        %852 = vrot.lane.b32.xlu0 %v846, 112
        %v853 = vpop.permute.xlu0 %852
        %854 = vrot.lane.b32.xlu0 %v847, 112
        %v855 = vpop.permute.xlu0 %854
        %856 = vrot.lane.b32.xlu0 %v848, 112
        %v857 = vpop.permute.xlu0 %856
        %v858 = vsel %vm764, %v853, %v855
        %v859 = vsel %vm764, %v855, %v857
        %v862 = vadd.f32 %v831, %v858
        %v863 = vadd.f32 %v832, %v859
        %864 = vst [vmem:[#allocation1] ss:$2 sm:$0xff] %v735
        %s865 = scalar_lea.vmem [#allocation1], 16
        %866 = vst [vmem:[%s865] ss:$2 sm:$0xff] %v736
        %v867 = vld.sshfl [vmem:[#allocation1] sm:$0xff pattern:$0x75316420]
        %v868 = vld.sshfl [vmem:[#allocation1 + $0x8] sm:$0xff pattern:$0x75316420]
        %v869 = vld.sshfl [vmem:[#allocation1 + $0x10] sm:$0xff pattern:$0x75316420]
        %870 = vrot.lane.b32.xlu0 %v867, 111
        %v871 = vpop.permute.xlu0 %870
        %872 = vrot.lane.b32.xlu0 %v868, 111
        %v873 = vpop.permute.xlu0 %872
        %874 = vrot.lane.b32.xlu0 %v869, 111
        %v875 = vpop.permute.xlu0 %874
        %vm876 = vcmask 908288
        %v877 = vsel %vm876, %v871, %v873
        %v878 = vsel %vm876, %v873, %v875
        %v881 = vsel %vm427, %v877, 0.0
        %v882 = vsel %vm428, %v878, 0.0
        %883 = vset.pattern.permute.xlu0 32
        %884 = vperm.xlu0 %883, %v227
        %v885 = vpop.permute.xlu0 %884
        %v887 = vperm.slane %v881, 0
        %v888 = vperm.slane %v882, 0
        %v889 = vmul.f32 %v885, %v887
        %v890 = vmul.f32 %v885, %v888
        %v891 = vadd.f32 %v862, %v889
        %v892 = vadd.f32 %v863, %v890
        %893 = vset.pattern.permute.xlu0 33
        %894 = vperm.xlu0 %893, %v227
        %v895 = vpop.permute.xlu0 %894
        %v897 = vperm.slane %v881, 1
        %v898 = vperm.slane %v882, 1
        %v899 = vmul.f32 %v895, %v897
        %v900 = vmul.f32 %v895, %v898
        %v901 = vadd.f32 %v891, %v899
        %v902 = vadd.f32 %v892, %v900
        %903 = vset.pattern.permute.xlu0 34
        %904 = vperm.xlu0 %903, %v227
        %v905 = vpop.permute.xlu0 %904
        %v907 = vperm.slane %v881, 2
        %v908 = vperm.slane %v882, 2
        %v909 = vmul.f32 %v905, %v907
        %v910 = vmul.f32 %v905, %v908
        %v911 = vadd.f32 %v901, %v909
        %v912 = vadd.f32 %v902, %v910
        %913 = vset.pattern.permute.xlu0 35
        %914 = vperm.xlu0 %913, %v227
        %v915 = vpop.permute.xlu0 %914
        %v917 = vperm.slane %v881, 3
        %v918 = vperm.slane %v882, 3
        %v919 = vmul.f32 %v915, %v917
        %v920 = vmul.f32 %v915, %v918
        %v921 = vadd.f32 %v911, %v919
        %v922 = vadd.f32 %v912, %v920
        %v923 = vld [vmem:[%s2] sm:$0xf]
        %925 = vset.pattern.permute.xlu0 0
        %926 = vperm.xlu0 %925, %v923
        %v927 = vpop.permute.xlu0 %926
        %v929 = vadd.f32 %v921, %v927
        %v930 = vadd.f32 %v922, %v927
        %932 = vst [vmem:[#allocation1] ss:$2 sm:$0xff] %v189
        %v933 = vld.sshfl [vmem:[#allocation1] sm:$0xff pattern:$0x75316420]
        %v934 = vld.sshfl [vmem:[#allocation1 + $0x8] sm:$0xff pattern:$0x75316420]
        %v937 = vadd.f32 %v929, %v933
        %v938 = vadd.f32 %v930, %v934
        %v939 = vmax.f32 %v937, 0.0
        %v940 = vmax.f32 %v938, 0.0
        %v943 = vrot.slane %v940, 4
        %v944 = vsel %vm191, %v939, %v943
        %946 = vst [vmem:[%s188] sm:$0xff] %v944
        %s947 = sand.u32 %s96, 1
        %s948 = scalar_lea.sflag [#allocation5], %s947
        %s949 = sand.u32 %s96, 1
        %s950 = smul.addr %s949, 8
        %s951 = scalar_lea.vmem [#allocation6], %s950
        // Predicated region
        $region37: #{tpu_custom_call.1} parent=31 // pred_check
          %p952 = pneg %p106
        $region38: #{tpu_custom_call.1} parent=31 // pred_check_branch
          %954 = sbr.rel (%p952) target = $region40
        $region39: #{tpu_custom_call.1} parent=31 // pred_region
          %956 = vsyncadd %s948, 0
          %s957 = smul.addr %s20, 2
          %s958 = smul.addr %s957, 4
          %s959 = scalar_lea.hbm %s3, %s958
          %s961 = sshll.u32 %s951, 4
          %s962 = int_to_ptr.vmem [resolvable:$true] %s961
          %s963 = sshll.u32 %s959, 4
          %s964 = int_to_ptr.hbm [resolvable:$true] %s963
          %966 = dma.vmem_to_hbm [thread:$0]  %s962, 128, %s964, %s948
        $region40: #{tpu_custom_call.1} parent=31 // pred_fallthru
          _
      $region32: #{tpu_custom_call.1} parent=5 // pred_fallthru
        _
      %p967 = scmp.le.s32.totalorder 2, %s15
      // Predicated region
      $region41: #{tpu_custom_call.1} parent=5 // pred_check
        %p968 = pneg %p967
      $region42: #{tpu_custom_call.1} parent=5 // pred_check_branch
        %970 = sbr.rel (%p968) target = $region44
      $region43: #{tpu_custom_call.1} parent=5 // pred_region
        %s971 = ssub.s32 %s15, 2
        // Predicated region
        $region45: #{tpu_custom_call.1} parent=43 // pred_check
          %p972 = pneg %p112
        $region46: #{tpu_custom_call.1} parent=43 // pred_check_branch
          %974 = sbr.rel (%p972) target = $region48
        $region47: #{tpu_custom_call.1} parent=43 // pred_region
          %s975 = sand.u32 %s97, 1
          %s976 = scalar_lea.sflag [#allocation5], %s975
          %s977 = sand.u32 %s97, 1
          %s978 = smul.addr %s977, 8
          %s979 = scalar_lea.vmem [#allocation6], %s978
          %981 = dma.done %s976, 128
        $region48: #{tpu_custom_call.1} parent=43 // pred_fallthru
          _
      $region44: #{tpu_custom_call.1} parent=5 // pred_fallthru
        _
    $region6: #{tpu_custom_call.1} parent=1 // loop_footer
      %s19 = sadd.s32 1, %s15
    $region7: #{tpu_custom_call.1} parent=1 // loop_footer_branch
      %14 = sbr.rel target = $region3
    $region8: #{tpu_custom_call.1} parent=1 // loop_exit
      _
    %982 = vsyncpa [#allocation4], 1
    %s983 = scalar_lea.sflag [#allocation4], 1
    %984 = vsyncpa %s983, 1
    %985 = vsyncpa [#allocation5], 1
    %s986 = scalar_lea.sflag [#allocation5], 1
    %987 = vsyncpa %s986, 1

</llo_original>
